<compile_context>
chip_gen: v7x
topology: tpu7x:2x2x1
jax: 0.10.0
libtpu: 0.0.40
codegen_flags: <defaults>
</compile_context>

<pallas_src>
import functools

import jax
import jax.numpy as jnp
from jax.experimental import pallas as pl
from jax.experimental.pallas import tpu as pltpu

LANE = 128


def _round_up(n, m=LANE):
    return ((n + m - 1) // m) * m


def _tpu_generation():
    try:
        kind = jax.devices()[0].device_kind.lower()
    except Exception:
        return None
    if "v7" in kind or "tpu7" in kind:
        return "v7"
    if "v6" in kind:
        return "v6"
    if "v5" in kind:
        return "v5"
    return None


def mlp_kernel(x_ref,
               w1_ref, b1_ref,
               w2_ref, b2_ref,
               w3_ref, b3_ref,
               w4_ref, b4_ref,
               w5_ref, b5_ref,
               w6_ref, b6_ref,
               o_ref, *, act_dtype):
    def layer(h, w_ref, b_ref, activate):
        # MXU matmul in the weights' dtype (bf16 on the fast path) with f32 accumulation.
        z = jnp.dot(h.astype(w_ref.dtype), w_ref[...],
                    preferred_element_type=jnp.float32) + b_ref[...]
        if activate:
            # tanh in act_dtype: bf16 on v6e/v7x (2x EUP rate, no cast before next dot),
            # f32 on v5e (no bf16 VPU/EUP there).
            return jnp.tanh(z.astype(act_dtype))
        return z

    h = x_ref[...]
    h = layer(h, w1_ref, b1_ref, True)
    h = layer(h, w2_ref, b2_ref, True)
    h = layer(h, w3_ref, b3_ref, True)
    h = layer(h, w4_ref, b4_ref, True)
    h = layer(h, w5_ref, b5_ref, True)
    o_ref[...] = layer(h, w6_ref, b6_ref, False).astype(o_ref.dtype)


def prepare_params(params, *, op_dtype=jnp.bfloat16):
    """Pad feature dims to 128-lane multiples (layer-0 input dim stays unpadded) and
    cast weights to op_dtype ONCE.  Call this at param-load time, not per forward."""
    prepared = []
    for li, (w, b) in enumerate(params):
        din, dout = w.shape
        din_p = din if li == 0 else _round_up(din)
        dout_p = _round_up(dout)
        w_p = jnp.pad(w, ((0, din_p - din), (0, dout_p - dout))).astype(op_dtype)
        b_p = jnp.pad(b, ((0, 0), (0, dout_p - dout))).astype(jnp.float32)
        prepared.append((w_p, b_p))
    return prepared


def _choose_tiling(B, *, max_tile=512, num_cores=1):
    if B <= max_tile:
        # Split across the 2 v7x TensorCores only if each gets >= 16 real rows.
        num_tiles = 2 if (num_cores >= 2 and B >= 32) else 1
        batch_tile = _round_up(pl.cdiv(B, num_tiles), 16)
    else:
        batch_tile = max_tile
        num_tiles = int(pl.cdiv(B, batch_tile))
        if num_cores >= 2 and num_tiles % 2:
            num_tiles += 1  # keep both TCs equally loaded
    return num_tiles, batch_tile


def model_regv4_t_forward(x, prepared, d_out, *, max_tile=512, num_cores=1,
                          act_dtype=jnp.float32):
    """Fused MLP forward.

    x: (B, d_in) float32 (unpadded).  prepared: output of prepare_params().
    Returns (B, d_out) float32.  Same semantics as the PyTorch module (bf16 matmul
    operands introduce ~1e-2 relative error)."""
    B, d_in = x.shape
    d_out_p = prepared[-1][0].shape[1]

    num_tiles, batch_tile = _choose_tiling(B, max_tile=max_tile, num_cores=num_cores)
    B_pad = num_tiles * batch_tile
    x_p = x if B_pad == B else jnp.pad(x, ((0, B_pad - B), (0, 0)))

    # x: full (unpadded) last dim -> legal block; cast to matmul dtype inside the kernel.
    in_specs = [pl.BlockSpec((batch_tile, d_in), lambda i: (i, 0))]
    flat_args = []
    for (w_p, b_p) in prepared:
        flat_args.extend([w_p, b_p])
        # Weights/biases: full-array blocks, constant index_map -> resident in VMEM.
        in_specs.append(pl.BlockSpec(w_p.shape, lambda i: (0, 0)))
        in_specs.append(pl.BlockSpec(b_p.shape, lambda i: (0, 0)))

    out_spec = pl.BlockSpec((batch_tile, d_out_p), lambda i: (i, 0))

    flops = 2 * B_pad * sum(int(w.shape[0]) * int(w.shape[1]) for (w, _) in prepared)
    transcendentals = B_pad * sum(int(w.shape[1]) for (w, _) in prepared[:-1])
    bytes_accessed = (B_pad * d_in * jnp.dtype(x.dtype).itemsize
                      + B_pad * d_out_p * 4
                      + sum(int(w.size) * jnp.dtype(w.dtype).itemsize
                            + int(b.size) * 4 for (w, b) in prepared))

    kernel = functools.partial(mlp_kernel, act_dtype=act_dtype)

    out_padded = pl.pallas_call(
        kernel,
        out_shape=jax.ShapeDtypeStruct((B_pad, d_out_p), jnp.float32),
        grid_spec=pl.GridSpec(
            grid=(num_tiles,),
            in_specs=in_specs,
            out_specs=out_spec,
        ),
        compiler_params=pltpu.CompilerParams(
            dimension_semantics=("parallel",),  # batch tiles are independent (megacore)
        ),
        cost_estimate=pl.CostEstimate(flops=flops,
                                      transcendentals=transcendentals,
                                      bytes_accessed=bytes_accessed),
    )(x_p, *flat_args)

    return out_padded[:B, :d_out]


def init_params(key, input_dim, output_dim):
    """Deterministic init matching ModelRegv4_t layer shapes (PyTorch default uniform)."""
    dims = [
        (input_dim, input_dim + 20),
        (input_dim + 20, input_dim + 10),
        (input_dim + 10, input_dim),
        (input_dim, input_dim // 2),
        (input_dim // 2, input_dim // 4),
        (input_dim // 4, output_dim),
    ]
    params = []
    for (din, dout) in dims:
        key, kw, kb = jax.random.split(key, 3)
        bound = 1.0 / jnp.sqrt(jnp.float32(din))
        w = jax.random.uniform(kw, (din, dout), jnp.float32, -bound, bound)
        b = jax.random.uniform(kb, (1, dout), jnp.float32, -bound, bound)
        params.append((w, b))
    return params


def reference_forward_f32(x, params):
    h = x
    for i, (w, b) in enumerate(params):
        h = h @ w + b
        if i < len(params) - 1:
            h = jnp.tanh(h)
    return h


def reference_forward_mixed(x, params, op_dtype, act_dtype):
    """Same arithmetic as the kernel: op_dtype matmul operands, f32 accumulate + bias,
    tanh computed in act_dtype."""
    h = x
    n = len(params)
    for i, (w, b) in enumerate(params):
        z = jnp.dot(h.astype(op_dtype), w.astype(op_dtype),
                    preferred_element_type=jnp.float32) + b
        h = jnp.tanh(z.astype(act_dtype)) if i < n - 1 else z
    return h


if __name__ == "__main__":
    input_dim = 32
    output_dim = 4
    batch = 8

    key = jax.random.PRNGKey(0)
    key, kx = jax.random.split(key)
    x = jax.random.normal(kx, (batch, input_dim), jnp.float32)
    params = init_params(key, input_dim, output_dim)

    gen = _tpu_generation()
    op_dtype = jnp.bfloat16
    act_dtype = jnp.bfloat16 if gen in ("v6", "v7") else jnp.float32
    num_cores = 2 if gen == "v7" else 1

    # Pad + cast the weights exactly once (not per forward call).
    prepared = prepare_params(params, op_dtype=op_dtype)

    fwd = jax.jit(functools.partial(model_regv4_t_forward,
                                    d_out=output_dim,
                                    max_tile=512,
                                    num_cores=num_cores,
                                    act_dtype=act_dtype))
    out = jax.block_until_ready(fwd(x, prepared))
    assert out.shape == (batch, output_dim)

    # Tight check vs. a pure-JAX reference using the same mixed-precision arithmetic.
    ref_mixed = reference_forward_mixed(x, params, op_dtype, act_dtype)
    assert jnp.allclose(out, ref_mixed, atol=1e-2, rtol=1e-2), \
        "mismatch vs mixed-precision JAX reference"

    # Loose sanity check vs. the full-f32 PyTorch-equivalent reference.
    ref_f32 = reference_forward_f32(x, params)
    max_err = float(jnp.max(jnp.abs(out - ref_f32)))
    assert max_err < 0.1, f"bf16 path drifted too far from f32 reference: {max_err}"

    print("KERNEL_OK")
</pallas_src>

<mosaic_0001>
module attributes {stable_mosaic.version = 11 : i64} {
  func.func @mlp_kernel(%arg0: i32, %arg1: memref<16x32xf32, #tpu.memory_space<vmem>>, %arg2: memref<32x128xbf16, #tpu.memory_space<vmem>>, %arg3: memref<1x128xf32, #tpu.memory_space<vmem>>, %arg4: memref<128x128xbf16, #tpu.memory_space<vmem>>, %arg5: memref<1x128xf32, #tpu.memory_space<vmem>>, %arg6: memref<128x128xbf16, #tpu.memory_space<vmem>>, %arg7: memref<1x128xf32, #tpu.memory_space<vmem>>, %arg8: memref<128x128xbf16, #tpu.memory_space<vmem>>, %arg9: memref<1x128xf32, #tpu.memory_space<vmem>>, %arg10: memref<128x128xbf16, #tpu.memory_space<vmem>>, %arg11: memref<1x128xf32, #tpu.memory_space<vmem>>, %arg12: memref<128x128xbf16, #tpu.memory_space<vmem>>, %arg13: memref<1x128xf32, #tpu.memory_space<vmem>>, %arg14: memref<16x128xf32, #tpu.memory_space<vmem>>) attributes {dimension_semantics = [#tpu.dimension_semantics<parallel>], iteration_bounds = array<i64: 1>, scalar_prefetch = 0 : i64, scratch_operands = 0 : i64, tpu.core_type = #tpu.core_type<tc>, window_params = [{transform_indices = @transform_0, window_bounds = array<i64: 16, 32>}, {pipeline_mode = #tpu.pipeline_mode<synchronous>, transform_indices = @transform_1, window_bounds = array<i64: 32, 128>}, {pipeline_mode = #tpu.pipeline_mode<synchronous>, transform_indices = @transform_2, window_bounds = array<i64: 1, 128>}, {pipeline_mode = #tpu.pipeline_mode<synchronous>, transform_indices = @transform_3, window_bounds = array<i64: 128, 128>}, {pipeline_mode = #tpu.pipeline_mode<synchronous>, transform_indices = @transform_4, window_bounds = array<i64: 1, 128>}, {pipeline_mode = #tpu.pipeline_mode<synchronous>, transform_indices = @transform_5, window_bounds = array<i64: 128, 128>}, {pipeline_mode = #tpu.pipeline_mode<synchronous>, transform_indices = @transform_6, window_bounds = array<i64: 1, 128>}, {pipeline_mode = #tpu.pipeline_mode<synchronous>, transform_indices = @transform_7, window_bounds = array<i64: 128, 128>}, {pipeline_mode = #tpu.pipeline_mode<synchronous>, transform_indices = @transform_8, window_bounds = array<i64: 1, 128>}, {pipeline_mode = #tpu.pipeline_mode<synchronous>, transform_indices = @transform_9, window_bounds = array<i64: 128, 128>}, {pipeline_mode = #tpu.pipeline_mode<synchronous>, transform_indices = @transform_10, window_bounds = array<i64: 1, 128>}, {pipeline_mode = #tpu.pipeline_mode<synchronous>, transform_indices = @transform_11, window_bounds = array<i64: 128, 128>}, {pipeline_mode = #tpu.pipeline_mode<synchronous>, transform_indices = @transform_12, window_bounds = array<i64: 1, 128>}, {transform_indices = @transform_13, window_bounds = array<i64: 16, 128>}]} {
    %c0 = arith.constant 0 : index
    %c0_0 = arith.constant 0 : index
    %0 = vector.load %arg1[%c0, %c0_0] : memref<16x32xf32, #tpu.memory_space<vmem>>, vector<16x32xf32>
    %1 = arith.truncf %0 : vector<16x32xf32> to vector<16x32xbf16>
    %c0_1 = arith.constant 0 : index
    %c0_2 = arith.constant 0 : index
    %2 = vector.load %arg2[%c0_1, %c0_2] : memref<32x128xbf16, #tpu.memory_space<vmem>>, vector<32x128xbf16>
    %cst = arith.constant dense<0.000000e+00> : vector<16x128xf32>
    %3 = tpu.matmul %1, %2, %cst {dimension_numbers = #tpu.dot_dimension_numbers<[1], [0], [0], [1], [0, 0, 1, 1], [], []>} : vector<16x32xbf16>, vector<32x128xbf16>, vector<16x128xf32> -> vector<16x128xf32>
    %c0_3 = arith.constant 0 : index
    %c0_4 = arith.constant 0 : index
    %4 = vector.load %arg3[%c0_3, %c0_4] : memref<1x128xf32, #tpu.memory_space<vmem>>, vector<1x128xf32>
    %5 = vector.broadcast %4 : vector<1x128xf32> to vector<16x128xf32>
    %6 = arith.addf %3, %5 : vector<16x128xf32>
    %7 = math.tanh %6 : vector<16x128xf32>
    %8 = arith.truncf %7 : vector<16x128xf32> to vector<16x128xbf16>
    %c0_5 = arith.constant 0 : index
    %c0_6 = arith.constant 0 : index
    %9 = vector.load %arg4[%c0_5, %c0_6] : memref<128x128xbf16, #tpu.memory_space<vmem>>, vector<128x128xbf16>
    %cst_7 = arith.constant dense<0.000000e+00> : vector<16x128xf32>
    %10 = tpu.matmul %8, %9, %cst_7 {dimension_numbers = #tpu.dot_dimension_numbers<[1], [0], [0], [1], [0, 0, 1, 1], [], []>} : vector<16x128xbf16>, vector<128x128xbf16>, vector<16x128xf32> -> vector<16x128xf32>
    %c0_8 = arith.constant 0 : index
    %c0_9 = arith.constant 0 : index
    %11 = vector.load %arg5[%c0_8, %c0_9] : memref<1x128xf32, #tpu.memory_space<vmem>>, vector<1x128xf32>
    %12 = vector.broadcast %11 : vector<1x128xf32> to vector<16x128xf32>
    %13 = arith.addf %10, %12 : vector<16x128xf32>
    %14 = math.tanh %13 : vector<16x128xf32>
    %15 = arith.truncf %14 : vector<16x128xf32> to vector<16x128xbf16>
    %c0_10 = arith.constant 0 : index
    %c0_11 = arith.constant 0 : index
    %16 = vector.load %arg6[%c0_10, %c0_11] : memref<128x128xbf16, #tpu.memory_space<vmem>>, vector<128x128xbf16>
    %cst_12 = arith.constant dense<0.000000e+00> : vector<16x128xf32>
    %17 = tpu.matmul %15, %16, %cst_12 {dimension_numbers = #tpu.dot_dimension_numbers<[1], [0], [0], [1], [0, 0, 1, 1], [], []>} : vector<16x128xbf16>, vector<128x128xbf16>, vector<16x128xf32> -> vector<16x128xf32>
    %c0_13 = arith.constant 0 : index
    %c0_14 = arith.constant 0 : index
    %18 = vector.load %arg7[%c0_13, %c0_14] : memref<1x128xf32, #tpu.memory_space<vmem>>, vector<1x128xf32>
    %19 = vector.broadcast %18 : vector<1x128xf32> to vector<16x128xf32>
    %20 = arith.addf %17, %19 : vector<16x128xf32>
    %21 = math.tanh %20 : vector<16x128xf32>
    %22 = arith.truncf %21 : vector<16x128xf32> to vector<16x128xbf16>
    %c0_15 = arith.constant 0 : index
    %c0_16 = arith.constant 0 : index
    %23 = vector.load %arg8[%c0_15, %c0_16] : memref<128x128xbf16, #tpu.memory_space<vmem>>, vector<128x128xbf16>
    %cst_17 = arith.constant dense<0.000000e+00> : vector<16x128xf32>
    %24 = tpu.matmul %22, %23, %cst_17 {dimension_numbers = #tpu.dot_dimension_numbers<[1], [0], [0], [1], [0, 0, 1, 1], [], []>} : vector<16x128xbf16>, vector<128x128xbf16>, vector<16x128xf32> -> vector<16x128xf32>
    %c0_18 = arith.constant 0 : index
    %c0_19 = arith.constant 0 : index
    %25 = vector.load %arg9[%c0_18, %c0_19] : memref<1x128xf32, #tpu.memory_space<vmem>>, vector<1x128xf32>
    %26 = vector.broadcast %25 : vector<1x128xf32> to vector<16x128xf32>
    %27 = arith.addf %24, %26 : vector<16x128xf32>
    %28 = math.tanh %27 : vector<16x128xf32>
    %29 = arith.truncf %28 : vector<16x128xf32> to vector<16x128xbf16>
    %c0_20 = arith.constant 0 : index
    %c0_21 = arith.constant 0 : index
    %30 = vector.load %arg10[%c0_20, %c0_21] : memref<128x128xbf16, #tpu.memory_space<vmem>>, vector<128x128xbf16>
    %cst_22 = arith.constant dense<0.000000e+00> : vector<16x128xf32>
    %31 = tpu.matmul %29, %30, %cst_22 {dimension_numbers = #tpu.dot_dimension_numbers<[1], [0], [0], [1], [0, 0, 1, 1], [], []>} : vector<16x128xbf16>, vector<128x128xbf16>, vector<16x128xf32> -> vector<16x128xf32>
    %c0_23 = arith.constant 0 : index
    %c0_24 = arith.constant 0 : index
    %32 = vector.load %arg11[%c0_23, %c0_24] : memref<1x128xf32, #tpu.memory_space<vmem>>, vector<1x128xf32>
    %33 = vector.broadcast %32 : vector<1x128xf32> to vector<16x128xf32>
    %34 = arith.addf %31, %33 : vector<16x128xf32>
    %35 = math.tanh %34 : vector<16x128xf32>
    %36 = arith.truncf %35 : vector<16x128xf32> to vector<16x128xbf16>
    %c0_25 = arith.constant 0 : index
    %c0_26 = arith.constant 0 : index
    %37 = vector.load %arg12[%c0_25, %c0_26] : memref<128x128xbf16, #tpu.memory_space<vmem>>, vector<128x128xbf16>
    %cst_27 = arith.constant dense<0.000000e+00> : vector<16x128xf32>
    %38 = tpu.matmul %36, %37, %cst_27 {dimension_numbers = #tpu.dot_dimension_numbers<[1], [0], [0], [1], [0, 0, 1, 1], [], []>} : vector<16x128xbf16>, vector<128x128xbf16>, vector<16x128xf32> -> vector<16x128xf32>
    %c0_28 = arith.constant 0 : index
    %c0_29 = arith.constant 0 : index
    %39 = vector.load %arg13[%c0_28, %c0_29] : memref<1x128xf32, #tpu.memory_space<vmem>>, vector<1x128xf32>
    %40 = vector.broadcast %39 : vector<1x128xf32> to vector<16x128xf32>
    %41 = arith.addf %38, %40 : vector<16x128xf32>
    %c0_30 = arith.constant 0 : index
    %c0_31 = arith.constant 0 : index
    %42 = vector.load %arg14[%c0_30, %c0_31] : memref<16x128xf32, #tpu.memory_space<vmem>>, vector<16x128xf32>
    tpu.vector_store %arg14[%c0_30, %c0_31], %41 {strides = array<i32>} : memref<16x128xf32, #tpu.memory_space<vmem>>, vector<16x128xf32>,
    return
  }
  func.func @transform_0(%arg0: i32) -> (i32, i32) {
    %c0_i32 = arith.constant 0 : i32
    %c0_i32_0 = arith.constant 0 : i32
    return %arg0, %c0_i32 : i32, i32
  }
  func.func @transform_1(%arg0: i32) -> (i32, i32) {
    %c0_i32 = arith.constant 0 : i32
    %c0_i32_0 = arith.constant 0 : i32
    %c0_i32_1 = arith.constant 0 : i32
    return %c0_i32, %c0_i32_0 : i32, i32
  }
  func.func @transform_2(%arg0: i32) -> (i32, i32) {
    %c0_i32 = arith.constant 0 : i32
    %c0_i32_0 = arith.constant 0 : i32
    %c0_i32_1 = arith.constant 0 : i32
    return %c0_i32, %c0_i32_0 : i32, i32
  }
  func.func @transform_3(%arg0: i32) -> (i32, i32) {
    %c0_i32 = arith.constant 0 : i32
    %c0_i32_0 = arith.constant 0 : i32
    %c0_i32_1 = arith.constant 0 : i32
    return %c0_i32, %c0_i32_0 : i32, i32
  }
  func.func @transform_4(%arg0: i32) -> (i32, i32) {
    %c0_i32 = arith.constant 0 : i32
    %c0_i32_0 = arith.constant 0 : i32
    %c0_i32_1 = arith.constant 0 : i32
    return %c0_i32, %c0_i32_0 : i32, i32
  }
  func.func @transform_5(%arg0: i32) -> (i32, i32) {
    %c0_i32 = arith.constant 0 : i32
    %c0_i32_0 = arith.constant 0 : i32
    %c0_i32_1 = arith.constant 0 : i32
    return %c0_i32, %c0_i32_0 : i32, i32
  }
  func.func @transform_6(%arg0: i32) -> (i32, i32) {
    %c0_i32 = arith.constant 0 : i32
    %c0_i32_0 = arith.constant 0 : i32
    %c0_i32_1 = arith.constant 0 : i32
    return %c0_i32, %c0_i32_0 : i32, i32
  }
  func.func @transform_7(%arg0: i32) -> (i32, i32) {
    %c0_i32 = arith.constant 0 : i32
    %c0_i32_0 = arith.constant 0 : i32
    %c0_i32_1 = arith.constant 0 : i32
    return %c0_i32, %c0_i32_0 : i32, i32
  }
  func.func @transform_8(%arg0: i32) -> (i32, i32) {
    %c0_i32 = arith.constant 0 : i32
    %c0_i32_0 = arith.constant 0 : i32
    %c0_i32_1 = arith.constant 0 : i32
    return %c0_i32, %c0_i32_0 : i32, i32
  }
  func.func @transform_9(%arg0: i32) -> (i32, i32) {
    %c0_i32 = arith.constant 0 : i32
    %c0_i32_0 = arith.constant 0 : i32
    %c0_i32_1 = arith.constant 0 : i32
    return %c0_i32, %c0_i32_0 : i32, i32
  }
  func.func @transform_10(%arg0: i32) -> (i32, i32) {
    %c0_i32 = arith.constant 0 : i32
    %c0_i32_0 = arith.constant 0 : i32
    %c0_i32_1 = arith.constant 0 : i32
    return %c0_i32, %c0_i32_0 : i32, i32
  }
  func.func @transform_11(%arg0: i32) -> (i32, i32) {
    %c0_i32 = arith.constant 0 : i32
    %c0_i32_0 = arith.constant 0 : i32
    %c0_i32_1 = arith.constant 0 : i32
    return %c0_i32, %c0_i32_0 : i32, i32
  }
  func.func @transform_12(%arg0: i32) -> (i32, i32) {
    %c0_i32 = arith.constant 0 : i32
    %c0_i32_0 = arith.constant 0 : i32
    %c0_i32_1 = arith.constant 0 : i32
    return %c0_i32, %c0_i32_0 : i32, i32
  }
  func.func @transform_13(%arg0: i32) -> (i32, i32) {
    %c0_i32 = arith.constant 0 : i32
    %c0_i32_0 = arith.constant 0 : i32
    return %arg0, %c0_i32 : i32, i32
  }
}

</mosaic_0001>

<llo_original>
// kernel: model_regv4_t_forward.1
$region0: #{model_regv4_t_forward.1}
  #allocation0 [shape = 'u32[]', space=smem, size = 0x4, offset = 0x4, fixed_abs, tag = 'smem constant byte address 0x4 - core index']
  #allocation1 [shape = 'u32[144,128]{1,0:T(1,128)}', space=vmem, size = 0x12000, scoped, tag = 'internal scratch']
  %s0 = inlined_call_operand.vmem [shape: f32[16,32], index: 0, kind: input, shape index: {}]
  %s1 = inlined_call_operand.hbm [shape: bf16[32,128], index: 1, kind: input, shape index: {}]
  %s2 = inlined_call_operand.vmem [shape: f32[1,128], index: 2, kind: input, shape index: {}]
  %s3 = inlined_call_operand.hbm [shape: bf16[128,128], index: 3, kind: input, shape index: {}]
  %s4 = inlined_call_operand.vmem [shape: f32[1,128], index: 4, kind: input, shape index: {}]
  %s5 = inlined_call_operand.hbm [shape: bf16[128,128], index: 5, kind: input, shape index: {}]
  %s6 = inlined_call_operand.hbm [shape: f32[1,128], index: 6, kind: input, shape index: {}]
  %s7 = inlined_call_operand.hbm [shape: bf16[128,128], index: 7, kind: input, shape index: {}]
  %s8 = inlined_call_operand.hbm [shape: f32[1,128], index: 8, kind: input, shape index: {}]
  %s9 = inlined_call_operand.hbm [shape: bf16[128,128], index: 9, kind: input, shape index: {}]
  %s10 = inlined_call_operand.hbm [shape: f32[1,128], index: 10, kind: input, shape index: {}]
  %s11 = inlined_call_operand.vmem [shape: bf16[128,128], index: 11, kind: input, shape index: {}]
  %s12 = inlined_call_operand.vmem [shape: f32[1,128], index: 12, kind: input, shape index: {}]
  %s13 = inlined_call_operand.vmem [shape: f32[16,128], index: 13, kind: output, shape index: {}]
  %s14 = sld [smem:[#allocation0]]
  $region94: #{model_regv4_t_forward.1} parent=0
    _
  %s16 = ssub.s32 1, %s14
  %s17 = scalar_select 0, %s16, %s14
  $region1: #{model_regv4_t_forward.1} parent=0
    #allocation2 [shape = 'u8[8192]{0}', space=vmem, size = 0x2000, scoped, tag = 'input window, operand 1, single buffered']
    #allocation3 [shape = 's32[1]{0}', space=sflag, size = 0x4, scoped, tag = 'scoped memory for model_regv4_t_forward.1']
    #allocation4 [shape = 'u8[32768]{0}', space=vmem, size = 0x8000, scoped, tag = 'input window, operand 3, single buffered']
    #allocation5 [shape = 's32[1]{0}', space=sflag, size = 0x4, scoped, tag = 'scoped memory for model_regv4_t_forward.1']
    #allocation6 [shape = 'u8[32768]{0}', space=vmem, size = 0x8000, scoped, tag = 'input window, operand 5, single buffered']
    #allocation7 [shape = 'u8[512]{0}', space=vmem, size = 0x400, scoped, tag = 'input window, operand 6, single buffered']
    #allocation8 [shape = 's32[1]{0}', space=sflag, size = 0x4, scoped, tag = 'scoped memory for model_regv4_t_forward.1']
    #allocation9 [shape = 'u8[32768]{0}', space=vmem, size = 0x8000, scoped, tag = 'input window, operand 7, single buffered']
    #allocation10 [shape = 'u8[512]{0}', space=vmem, size = 0x400, scoped, tag = 'input window, operand 8, single buffered']
    #allocation11 [shape = 's32[1]{0}', space=sflag, size = 0x4, scoped, tag = 'scoped memory for model_regv4_t_forward.1']
    #allocation12 [shape = 'u8[32768]{0}', space=vmem, size = 0x8000, scoped, tag = 'input window, operand 9, single buffered']
    #allocation13 [shape = 'u8[512]{0}', space=vmem, size = 0x400, scoped, tag = 'input window, operand 10, single buffered']
    #allocation14 [shape = 's32[1]{0}', space=sflag, size = 0x4, scoped, tag = 'scoped memory for model_regv4_t_forward.1']
    %18 = vsyncpa [#allocation3], 0
    %19 = vsyncpa [#allocation5], 0
    %20 = vsyncpa [#allocation8], 0
    %21 = vsyncpa [#allocation11], 0
    %22 = vsyncpa [#allocation14], 0
    // Predicated region
    $region2: #{model_regv4_t_forward.1} parent=1 // pred_check
      _
    $region3: #{model_regv4_t_forward.1} parent=1 // pred_check_branch
      %24 = sbr.rel (0) target = $region5
    $region4: #{model_regv4_t_forward.1} parent=1 // pred_region
      _
    $region5: #{model_regv4_t_forward.1} parent=1 // pred_fallthru
      _
    // Predicated region
    $region6: #{model_regv4_t_forward.1} parent=1 // pred_check
      _
    $region7: #{model_regv4_t_forward.1} parent=1 // pred_check_branch
      %26 = sbr.rel (0) target = $region9
    $region8: #{model_regv4_t_forward.1} parent=1 // pred_region
      %s28 = ssub.s32 256, 256
      %29 = vsyncadd [#allocation3], %s28
      %s30 = sshll.u32 [#allocation2], 4
      %s31 = int_to_ptr.vmem [resolvable:$true] %s30
      %36 = dma.hbm_to_vmem [thread:$0]  %s1, 256, %s31, [#allocation3], 64, 64, 4
    $region9: #{model_regv4_t_forward.1} parent=1 // pred_fallthru
      _
    // Predicated region
    $region10: #{model_regv4_t_forward.1} parent=1 // pred_check
      _
    $region11: #{model_regv4_t_forward.1} parent=1 // pred_check_branch
      %38 = sbr.rel (0) target = $region13
    $region12: #{model_regv4_t_forward.1} parent=1 // pred_region
      _
    $region13: #{model_regv4_t_forward.1} parent=1 // pred_fallthru
      _
    // Predicated region
    $region14: #{model_regv4_t_forward.1} parent=1 // pred_check
      _
    $region15: #{model_regv4_t_forward.1} parent=1 // pred_check_branch
      %40 = sbr.rel (0) target = $region17
    $region16: #{model_regv4_t_forward.1} parent=1 // pred_region
      %s42 = ssub.s32 1024, 1024
      %43 = vsyncadd [#allocation5], %s42
      %s44 = sshll.u32 [#allocation4], 4
      %s45 = int_to_ptr.vmem [resolvable:$true] %s44
      %50 = dma.hbm_to_vmem [thread:$0]  %s3, 1024, %s45, [#allocation5], 64, 64, 4
    $region17: #{model_regv4_t_forward.1} parent=1 // pred_fallthru
      _
    // Predicated region
    $region18: #{model_regv4_t_forward.1} parent=1 // pred_check
      _
    $region19: #{model_regv4_t_forward.1} parent=1 // pred_check_branch
      %52 = sbr.rel (0) target = $region21
    $region20: #{model_regv4_t_forward.1} parent=1 // pred_region
      _
    $region21: #{model_regv4_t_forward.1} parent=1 // pred_fallthru
      _
    // Predicated region
    $region22: #{model_regv4_t_forward.1} parent=1 // pred_check
      _
    $region23: #{model_regv4_t_forward.1} parent=1 // pred_check_branch
      %54 = sbr.rel (0) target = $region25
    $region24: #{model_regv4_t_forward.1} parent=1 // pred_region
      %s56 = ssub.s32 1024, 1024
      %57 = vsyncadd [#allocation5], %s56
      %s58 = sshll.u32 [#allocation6], 4
      %s59 = int_to_ptr.vmem [resolvable:$true] %s58
      %64 = dma.hbm_to_vmem [thread:$0]  %s5, 1024, %s59, [#allocation5], 64, 64, 4
    $region25: #{model_regv4_t_forward.1} parent=1 // pred_fallthru
      _
    // Predicated region
    $region26: #{model_regv4_t_forward.1} parent=1 // pred_check
      _
    $region27: #{model_regv4_t_forward.1} parent=1 // pred_check_branch
      %66 = sbr.rel (0) target = $region29
    $region28: #{model_regv4_t_forward.1} parent=1 // pred_region
      %s68 = ssub.s32 16, 16
      %69 = vsyncadd [#allocation8], %s68
      %s71 = sshll.u32 [#allocation7], 4
      %s72 = int_to_ptr.vmem [resolvable:$true] %s71
      %74 = dma.hbm_to_vmem [thread:$0]  %s6, 16, %s72, [#allocation8]
    $region29: #{model_regv4_t_forward.1} parent=1 // pred_fallthru
      _
    // Predicated region
    $region30: #{model_regv4_t_forward.1} parent=1 // pred_check
      _
    $region31: #{model_regv4_t_forward.1} parent=1 // pred_check_branch
      %76 = sbr.rel (0) target = $region33
    $region32: #{model_regv4_t_forward.1} parent=1 // pred_region
      %s78 = ssub.s32 1024, 1024
      %79 = vsyncadd [#allocation8], %s78
      %s80 = sshll.u32 [#allocation9], 4
      %s81 = int_to_ptr.vmem [resolvable:$true] %s80
      %86 = dma.hbm_to_vmem [thread:$0]  %s7, 1024, %s81, [#allocation8], 64, 64, 4
    $region33: #{model_regv4_t_forward.1} parent=1 // pred_fallthru
      _
    // Predicated region
    $region34: #{model_regv4_t_forward.1} parent=1 // pred_check
      _
    $region35: #{model_regv4_t_forward.1} parent=1 // pred_check_branch
      %88 = sbr.rel (0) target = $region37
    $region36: #{model_regv4_t_forward.1} parent=1 // pred_region
      %s90 = ssub.s32 16, 16
      %91 = vsyncadd [#allocation11], %s90
      %s93 = sshll.u32 [#allocation10], 4
      %s94 = int_to_ptr.vmem [resolvable:$true] %s93
      %96 = dma.hbm_to_vmem [thread:$0]  %s8, 16, %s94, [#allocation11]
    $region37: #{model_regv4_t_forward.1} parent=1 // pred_fallthru
      _
    // Predicated region
    $region38: #{model_regv4_t_forward.1} parent=1 // pred_check
      _
    $region39: #{model_regv4_t_forward.1} parent=1 // pred_check_branch
      %98 = sbr.rel (0) target = $region41
    $region40: #{model_regv4_t_forward.1} parent=1 // pred_region
      %s100 = ssub.s32 1024, 1024
      %101 = vsyncadd [#allocation11], %s100
      %s102 = sshll.u32 [#allocation12], 4
      %s103 = int_to_ptr.vmem [resolvable:$true] %s102
      %108 = dma.hbm_to_vmem [thread:$0]  %s9, 1024, %s103, [#allocation11], 64, 64, 4
    $region41: #{model_regv4_t_forward.1} parent=1 // pred_fallthru
      _
    // Predicated region
    $region42: #{model_regv4_t_forward.1} parent=1 // pred_check
      _
    $region43: #{model_regv4_t_forward.1} parent=1 // pred_check_branch
      %110 = sbr.rel (0) target = $region45
    $region44: #{model_regv4_t_forward.1} parent=1 // pred_region
      %s112 = ssub.s32 16, 16
      %113 = vsyncadd [#allocation14], %s112
      %s115 = sshll.u32 [#allocation13], 4
      %s116 = int_to_ptr.vmem [resolvable:$true] %s115
      %118 = dma.hbm_to_vmem [thread:$0]  %s10, 16, %s116, [#allocation14]
    $region45: #{model_regv4_t_forward.1} parent=1 // pred_fallthru
      _
    // Predicated region
    $region46: #{model_regv4_t_forward.1} parent=1 // pred_check
      _
    $region47: #{model_regv4_t_forward.1} parent=1 // pred_check_branch
      %120 = sbr.rel (0) target = $region49
    $region48: #{model_regv4_t_forward.1} parent=1 // pred_region
      _
    $region49: #{model_regv4_t_forward.1} parent=1 // pred_fallthru
      _
    // Predicated region
    $region50: #{model_regv4_t_forward.1} parent=1 // pred_check
      _
    $region51: #{model_regv4_t_forward.1} parent=1 // pred_check_branch
      %122 = sbr.rel (0) target = $region53
    $region52: #{model_regv4_t_forward.1} parent=1 // pred_region
      _
    $region53: #{model_regv4_t_forward.1} parent=1 // pred_fallthru
      _
    // Predicated region
    $region54: #{model_regv4_t_forward.1} parent=1 // pred_check
      _
    $region55: #{model_regv4_t_forward.1} parent=1 // pred_check_branch
      %124 = sbr.rel (0) target = $region57
    $region56: #{model_regv4_t_forward.1} parent=1 // pred_region
      %125 = dma.done [#allocation3], 256
    $region57: #{model_regv4_t_forward.1} parent=1 // pred_fallthru
      _
    // Predicated region
    $region58: #{model_regv4_t_forward.1} parent=1 // pred_check
      _
    $region59: #{model_regv4_t_forward.1} parent=1 // pred_check_branch
      %127 = sbr.rel (0) target = $region61
    $region60: #{model_regv4_t_forward.1} parent=1 // pred_region
      %128 = dma.done [#allocation5], 1024
    $region61: #{model_regv4_t_forward.1} parent=1 // pred_fallthru
      _
    // Predicated region
    $region62: #{model_regv4_t_forward.1} parent=1 // pred_check
      _
    $region63: #{model_regv4_t_forward.1} parent=1 // pred_check_branch
      %130 = sbr.rel (0) target = $region65
    $region64: #{model_regv4_t_forward.1} parent=1 // pred_region
      %131 = dma.done [#allocation5], 1024
    $region65: #{model_regv4_t_forward.1} parent=1 // pred_fallthru
      _
    // Predicated region
    $region66: #{model_regv4_t_forward.1} parent=1 // pred_check
      _
    $region67: #{model_regv4_t_forward.1} parent=1 // pred_check_branch
      %133 = sbr.rel (0) target = $region69
    $region68: #{model_regv4_t_forward.1} parent=1 // pred_region
      %134 = dma.done [#allocation8], 16
    $region69: #{model_regv4_t_forward.1} parent=1 // pred_fallthru
      _
    // Predicated region
    $region70: #{model_regv4_t_forward.1} parent=1 // pred_check
      _
    $region71: #{model_regv4_t_forward.1} parent=1 // pred_check_branch
      %136 = sbr.rel (0) target = $region73
    $region72: #{model_regv4_t_forward.1} parent=1 // pred_region
      %137 = dma.done [#allocation8], 1024
    $region73: #{model_regv4_t_forward.1} parent=1 // pred_fallthru
      _
    // Predicated region
    $region74: #{model_regv4_t_forward.1} parent=1 // pred_check
      _
    $region75: #{model_regv4_t_forward.1} parent=1 // pred_check_branch
      %139 = sbr.rel (0) target = $region77
    $region76: #{model_regv4_t_forward.1} parent=1 // pred_region
      %140 = dma.done [#allocation11], 16
    $region77: #{model_regv4_t_forward.1} parent=1 // pred_fallthru
      _
    // Predicated region
    $region78: #{model_regv4_t_forward.1} parent=1 // pred_check
      _
    $region79: #{model_regv4_t_forward.1} parent=1 // pred_check_branch
      %142 = sbr.rel (0) target = $region81
    $region80: #{model_regv4_t_forward.1} parent=1 // pred_region
      %143 = dma.done [#allocation11], 1024
    $region81: #{model_regv4_t_forward.1} parent=1 // pred_fallthru
      _
    // Predicated region
    $region82: #{model_regv4_t_forward.1} parent=1 // pred_check
      _
    $region83: #{model_regv4_t_forward.1} parent=1 // pred_check_branch
      %145 = sbr.rel (0) target = $region85
    $region84: #{model_regv4_t_forward.1} parent=1 // pred_region
      %146 = dma.done [#allocation14], 16
    $region85: #{model_regv4_t_forward.1} parent=1 // pred_fallthru
      _
    %v148 = vld [vmem:[%s0] sm:$0xff]
    %v149 = vld [vmem:[%s0 + $0x8] sm:$0xff]
    %v150 = vpack.c.bf16 %v149, %v148
    %v151 = vld [vmem:[#allocation2] sm:$0xf]
    %v152 = vld [vmem:[#allocation2 + $0x4] sm:$0xf]
    %v153 = vld [vmem:[#allocation2 + $0x8] sm:$0xf]
    %v154 = vld [vmem:[#allocation2 + $0xc] sm:$0xf]
    %v155 = vld [vmem:[%s2] sm:$0x1]
    %v157 = vlaneseq
    %v158 = vshrl.u32 %v157, 7
    %v159 = vsub.s32 0, %v158
    %v160 = vrot.slane %v155, %v159
    %v166 = vunpack.c.l.b16 %v151
    %v167 = vunpack.c.l.b16 %v152
    %v168 = vunpack.c.l.b16 %v153
    %v169 = vunpack.c.l.b16 %v154
    %v170 = vpack.c.b16 %v167, %v166
    %v171 = vpack.c.b16 %v169, %v168
    %vm174 = vcmask 261120
    %v176 = vsel %vm174, %v150, 0
    %178 = vmatprep.subr.bf16.mxu0 0
    %179 = vmatpush1.bf16.msra.mxu0 %v170
    %180 = vmatprep.subr.bf16.mxu0 0
    %181 = vmatpush1.bf16.msra.mxu0 %v171
    %182 = vmatprep.subr.bf16.mxu0 0
    %183 = vmatpush1.bf16.msra.mxu0 0
    %184 = vmatprep.subr.bf16.mxu0 0
    %185 = vmatpush1.bf16.msra.mxu0 0
    %186 = vmatprep.subr.bf16.mxu0 0
    %187 = vmatpush1.bf16.msra.mxu0 0
    %188 = vmatprep.subr.bf16.mxu0 0
    %189 = vmatpush1.bf16.msra.mxu0 0
    %190 = vmatprep.subr.bf16.mxu0 0
    %191 = vmatpush1.bf16.msra.mxu0 0
    %192 = vmatprep.subr.bf16.mxu0 0
    %193 = vmatpush1.bf16.msra.mxu0 0
    %194 = vmatprep.subr.bf16.mxu0 0
    %195 = vmatpush1.bf16.msra.mxu0 0
    %196 = vmatprep.subr.bf16.mxu0 0
    %197 = vmatpush1.bf16.msra.mxu0 0
    %198 = vmatprep.subr.bf16.mxu0 0
    %199 = vmatpush1.bf16.msra.mxu0 0
    %200 = vmatprep.subr.bf16.mxu0 0
    %201 = vmatpush1.bf16.msra.mxu0 0
    %202 = vmatprep.subr.bf16.mxu0 0
    %203 = vmatpush1.bf16.msra.mxu0 0
    %204 = vmatprep.subr.bf16.mxu0 0
    %205 = vmatpush1.bf16.msra.mxu0 0
    %206 = vmatprep.subr.bf16.mxu0 0
    %207 = vmatpush1.bf16.msra.mxu0 0
    %208 = vmatprep.subr.bf16.mxu0 0
    %209 = vmatpush1.bf16.msra.mxu0 0
    %210 = vmatprep.mubr.bf16.mxu0 0
    %211 = vmatmul.mubr.bf16.gmra.mrb[0].mxu0 %v176
    %v212 = vpop.f32.mrb[0].mxu0
    %v213 = vadd.f32 %v160, %v212
    %v214 = vpop.f32.mrb[0].mxu0
    %v215 = vpop.f32.mrb[0].mxu0
    %v216 = vadd.f32 %v160, %v215
    %v217 = vpop.f32.mrb[0].mxu0
    %218 = vdwg.mxu0
    %v219 = vtanh.pop %v213
    %v220 = vtanh.pop %v216
    %v221 = vpack.c.bf16 %v220, %v219
    %v222 = vld [vmem:[#allocation4] sm:$0xf]
    %v223 = vld [vmem:[#allocation4 + $0x4] sm:$0xf]
    %v224 = vld [vmem:[#allocation4 + $0x8] sm:$0xf]
    %v225 = vld [vmem:[#allocation4 + $0xc] sm:$0xf]
    %v226 = vld [vmem:[#allocation4 + $0x10] sm:$0xf]
    %v227 = vld [vmem:[#allocation4 + $0x14] sm:$0xf]
    %v228 = vld [vmem:[#allocation4 + $0x18] sm:$0xf]
    %v229 = vld [vmem:[#allocation4 + $0x1c] sm:$0xf]
    %v230 = vld [vmem:[#allocation4 + $0x20] sm:$0xf]
    %v231 = vld [vmem:[#allocation4 + $0x24] sm:$0xf]
    %v232 = vld [vmem:[#allocation4 + $0x28] sm:$0xf]
    %v233 = vld [vmem:[#allocation4 + $0x2c] sm:$0xf]
    %v234 = vld [vmem:[#allocation4 + $0x30] sm:$0xf]
    %v235 = vld [vmem:[#allocation4 + $0x34] sm:$0xf]
    %v236 = vld [vmem:[#allocation4 + $0x38] sm:$0xf]
    %v237 = vld [vmem:[#allocation4 + $0x3c] sm:$0xf]
    %v238 = vld [vmem:[%s4] sm:$0x1]
    %v240 = vlaneseq
    %v241 = vshrl.u32 %v240, 7
    %v242 = vsub.s32 0, %v241
    %v243 = vrot.slane %v238, %v242
    %v261 = vunpack.c.l.b16 %v222
    %v262 = vunpack.c.l.b16 %v223
    %v263 = vunpack.c.l.b16 %v224
    %v264 = vunpack.c.l.b16 %v225
    %v265 = vunpack.c.l.b16 %v226
    %v266 = vunpack.c.l.b16 %v227
    %v267 = vunpack.c.l.b16 %v228
    %v268 = vunpack.c.l.b16 %v229
    %v269 = vunpack.c.l.b16 %v230
    %v270 = vunpack.c.l.b16 %v231
    %v271 = vunpack.c.l.b16 %v232
    %v272 = vunpack.c.l.b16 %v233
    %v273 = vunpack.c.l.b16 %v234
    %v274 = vunpack.c.l.b16 %v235
    %v275 = vunpack.c.l.b16 %v236
    %v276 = vunpack.c.l.b16 %v237
    %v277 = vpack.c.b16 %v262, %v261
    %v278 = vpack.c.b16 %v264, %v263
    %v279 = vpack.c.b16 %v266, %v265
    %v280 = vpack.c.b16 %v268, %v267
    %v281 = vpack.c.b16 %v270, %v269
    %v282 = vpack.c.b16 %v272, %v271
    %v283 = vpack.c.b16 %v274, %v273
    %v284 = vpack.c.b16 %v276, %v275
    %293 = vmatprep.subr.bf16.mxu0 0
    %294 = vmatpush1.bf16.msra.mxu0 %v277
    %295 = vmatprep.subr.bf16.mxu0 0
    %296 = vmatpush1.bf16.msra.mxu0 %v278
    %297 = vmatprep.subr.bf16.mxu0 0
    %298 = vmatpush1.bf16.msra.mxu0 %v279
    %299 = vmatprep.subr.bf16.mxu0 0
    %300 = vmatpush1.bf16.msra.mxu0 %v280
    %301 = vmatprep.subr.bf16.mxu0 0
    %302 = vmatpush1.bf16.msra.mxu0 %v281
    %303 = vmatprep.subr.bf16.mxu0 0
    %304 = vmatpush1.bf16.msra.mxu0 %v282
    %305 = vmatprep.subr.bf16.mxu0 0
    %306 = vmatpush1.bf16.msra.mxu0 %v283
    %307 = vmatprep.subr.bf16.mxu0 0
    %308 = vmatpush1.bf16.msra.mxu0 %v284
    %309 = vmatprep.subr.bf16.mxu0 0
    %310 = vmatpush1.bf16.msra.mxu0 0
    %311 = vmatprep.subr.bf16.mxu0 0
    %312 = vmatpush1.bf16.msra.mxu0 0
    %313 = vmatprep.subr.bf16.mxu0 0
    %314 = vmatpush1.bf16.msra.mxu0 0
    %315 = vmatprep.subr.bf16.mxu0 0
    %316 = vmatpush1.bf16.msra.mxu0 0
    %317 = vmatprep.subr.bf16.mxu0 0
    %318 = vmatpush1.bf16.msra.mxu0 0
    %319 = vmatprep.subr.bf16.mxu0 0
    %320 = vmatpush1.bf16.msra.mxu0 0
    %321 = vmatprep.subr.bf16.mxu0 0
    %322 = vmatpush1.bf16.msra.mxu0 0
    %323 = vmatprep.subr.bf16.mxu0 0
    %324 = vmatpush1.bf16.msra.mxu0 0
    %325 = vmatprep.mubr.bf16.mxu0 0
    %326 = vmatmul.mubr.bf16.gmra.mrb[0].mxu0 %v221
    %v327 = vpop.f32.mrb[0].mxu0
    %v328 = vadd.f32 %v243, %v327
    %v329 = vpop.f32.mrb[0].mxu0
    %v330 = vpop.f32.mrb[0].mxu0
    %v331 = vadd.f32 %v243, %v330
    %v332 = vpop.f32.mrb[0].mxu0
    %333 = vdwg.mxu0
    %v334 = vtanh.pop %v328
    %v335 = vtanh.pop %v331
    %v336 = vpack.c.bf16 %v335, %v334
    %v337 = vld [vmem:[#allocation6] sm:$0xf]
    %v338 = vld [vmem:[#allocation6 + $0x4] sm:$0xf]
    %v339 = vld [vmem:[#allocation6 + $0x8] sm:$0xf]
    %v340 = vld [vmem:[#allocation6 + $0xc] sm:$0xf]
    %v341 = vld [vmem:[#allocation6 + $0x10] sm:$0xf]
    %v342 = vld [vmem:[#allocation6 + $0x14] sm:$0xf]
    %v343 = vld [vmem:[#allocation6 + $0x18] sm:$0xf]
    %v344 = vld [vmem:[#allocation6 + $0x1c] sm:$0xf]
    %v345 = vld [vmem:[#allocation6 + $0x20] sm:$0xf]
    %v346 = vld [vmem:[#allocation6 + $0x24] sm:$0xf]
    %v347 = vld [vmem:[#allocation6 + $0x28] sm:$0xf]
    %v348 = vld [vmem:[#allocation6 + $0x2c] sm:$0xf]
    %v349 = vld [vmem:[#allocation6 + $0x30] sm:$0xf]
    %v350 = vld [vmem:[#allocation6 + $0x34] sm:$0xf]
    %v351 = vld [vmem:[#allocation6 + $0x38] sm:$0xf]
    %v352 = vld [vmem:[#allocation6 + $0x3c] sm:$0xf]
    %v353 = vld [vmem:[#allocation7] sm:$0x1]
    %v355 = vlaneseq
    %v356 = vshrl.u32 %v355, 7
    %v357 = vsub.s32 0, %v356
    %v358 = vrot.slane %v353, %v357
    %v376 = vunpack.c.l.b16 %v337
    %v377 = vunpack.c.l.b16 %v338
    %v378 = vunpack.c.l.b16 %v339
    %v379 = vunpack.c.l.b16 %v340
    %v380 = vunpack.c.l.b16 %v341
    %v381 = vunpack.c.l.b16 %v342
    %v382 = vunpack.c.l.b16 %v343
    %v383 = vunpack.c.l.b16 %v344
    %v384 = vunpack.c.l.b16 %v345
    %v385 = vunpack.c.l.b16 %v346
    %v386 = vunpack.c.l.b16 %v347
    %v387 = vunpack.c.l.b16 %v348
    %v388 = vunpack.c.l.b16 %v349
    %v389 = vunpack.c.l.b16 %v350
    %v390 = vunpack.c.l.b16 %v351
    %v391 = vunpack.c.l.b16 %v352
    %v392 = vpack.c.b16 %v377, %v376
    %v393 = vpack.c.b16 %v379, %v378
    %v394 = vpack.c.b16 %v381, %v380
    %v395 = vpack.c.b16 %v383, %v382
    %v396 = vpack.c.b16 %v385, %v384
    %v397 = vpack.c.b16 %v387, %v386
    %v398 = vpack.c.b16 %v389, %v388
    %v399 = vpack.c.b16 %v391, %v390
    %408 = vmatprep.subr.bf16.mxu0 0
    %409 = vmatpush1.bf16.msra.mxu0 %v392
    %410 = vmatprep.subr.bf16.mxu0 0
    %411 = vmatpush1.bf16.msra.mxu0 %v393
    %412 = vmatprep.subr.bf16.mxu0 0
    %413 = vmatpush1.bf16.msra.mxu0 %v394
    %414 = vmatprep.subr.bf16.mxu0 0
    %415 = vmatpush1.bf16.msra.mxu0 %v395
    %416 = vmatprep.subr.bf16.mxu0 0
    %417 = vmatpush1.bf16.msra.mxu0 %v396
    %418 = vmatprep.subr.bf16.mxu0 0
    %419 = vmatpush1.bf16.msra.mxu0 %v397
    %420 = vmatprep.subr.bf16.mxu0 0
    %421 = vmatpush1.bf16.msra.mxu0 %v398
    %422 = vmatprep.subr.bf16.mxu0 0
    %423 = vmatpush1.bf16.msra.mxu0 %v399
    %424 = vmatprep.subr.bf16.mxu0 0
    %425 = vmatpush1.bf16.msra.mxu0 0
    %426 = vmatprep.subr.bf16.mxu0 0
    %427 = vmatpush1.bf16.msra.mxu0 0
    %428 = vmatprep.subr.bf16.mxu0 0
    %429 = vmatpush1.bf16.msra.mxu0 0
    %430 = vmatprep.subr.bf16.mxu0 0
    %431 = vmatpush1.bf16.msra.mxu0 0
    %432 = vmatprep.subr.bf16.mxu0 0
    %433 = vmatpush1.bf16.msra.mxu0 0
    %434 = vmatprep.subr.bf16.mxu0 0
    %435 = vmatpush1.bf16.msra.mxu0 0
    %436 = vmatprep.subr.bf16.mxu0 0
    %437 = vmatpush1.bf16.msra.mxu0 0
    %438 = vmatprep.subr.bf16.mxu0 0
    %439 = vmatpush1.bf16.msra.mxu0 0
    %440 = vmatprep.mubr.bf16.mxu0 0
    %441 = vmatmul.mubr.bf16.gmra.mrb[0].mxu0 %v336
    %v442 = vpop.f32.mrb[0].mxu0
    %v443 = vadd.f32 %v358, %v442
    %v444 = vpop.f32.mrb[0].mxu0
    %v445 = vpop.f32.mrb[0].mxu0
    %v446 = vadd.f32 %v358, %v445
    %v447 = vpop.f32.mrb[0].mxu0
    %448 = vdwg.mxu0
    %v449 = vtanh.pop %v443
    %v450 = vtanh.pop %v446
    %v451 = vpack.c.bf16 %v450, %v449
    %v452 = vld [vmem:[#allocation9] sm:$0xf]
    %v453 = vld [vmem:[#allocation9 + $0x4] sm:$0xf]
    %v454 = vld [vmem:[#allocation9 + $0x8] sm:$0xf]
    %v455 = vld [vmem:[#allocation9 + $0xc] sm:$0xf]
    %v456 = vld [vmem:[#allocation9 + $0x10] sm:$0xf]
    %v457 = vld [vmem:[#allocation9 + $0x14] sm:$0xf]
    %v458 = vld [vmem:[#allocation9 + $0x18] sm:$0xf]
    %v459 = vld [vmem:[#allocation9 + $0x1c] sm:$0xf]
    %v460 = vld [vmem:[#allocation9 + $0x20] sm:$0xf]
    %v461 = vld [vmem:[#allocation9 + $0x24] sm:$0xf]
    %v462 = vld [vmem:[#allocation9 + $0x28] sm:$0xf]
    %v463 = vld [vmem:[#allocation9 + $0x2c] sm:$0xf]
    %v464 = vld [vmem:[#allocation9 + $0x30] sm:$0xf]
    %v465 = vld [vmem:[#allocation9 + $0x34] sm:$0xf]
    %v466 = vld [vmem:[#allocation9 + $0x38] sm:$0xf]
    %v467 = vld [vmem:[#allocation9 + $0x3c] sm:$0xf]
    %v468 = vld [vmem:[#allocation10] sm:$0x1]
    %v470 = vlaneseq
    %v471 = vshrl.u32 %v470, 7
    %v472 = vsub.s32 0, %v471
    %v473 = vrot.slane %v468, %v472
    %v491 = vunpack.c.l.b16 %v452
    %v492 = vunpack.c.l.b16 %v453
    %v493 = vunpack.c.l.b16 %v454
    %v494 = vunpack.c.l.b16 %v455
    %v495 = vunpack.c.l.b16 %v456
    %v496 = vunpack.c.l.b16 %v457
    %v497 = vunpack.c.l.b16 %v458
    %v498 = vunpack.c.l.b16 %v459
    %v499 = vunpack.c.l.b16 %v460
    %v500 = vunpack.c.l.b16 %v461
    %v501 = vunpack.c.l.b16 %v462
    %v502 = vunpack.c.l.b16 %v463
    %v503 = vunpack.c.l.b16 %v464
    %v504 = vunpack.c.l.b16 %v465
    %v505 = vunpack.c.l.b16 %v466
    %v506 = vunpack.c.l.b16 %v467
    %v507 = vpack.c.b16 %v492, %v491
    %v508 = vpack.c.b16 %v494, %v493
    %v509 = vpack.c.b16 %v496, %v495
    %v510 = vpack.c.b16 %v498, %v497
    %v511 = vpack.c.b16 %v500, %v499
    %v512 = vpack.c.b16 %v502, %v501
    %v513 = vpack.c.b16 %v504, %v503
    %v514 = vpack.c.b16 %v506, %v505
    %523 = vmatprep.subr.bf16.mxu0 0
    %524 = vmatpush1.bf16.msra.mxu0 %v507
    %525 = vmatprep.subr.bf16.mxu0 0
    %526 = vmatpush1.bf16.msra.mxu0 %v508
    %527 = vmatprep.subr.bf16.mxu0 0
    %528 = vmatpush1.bf16.msra.mxu0 %v509
    %529 = vmatprep.subr.bf16.mxu0 0
    %530 = vmatpush1.bf16.msra.mxu0 %v510
    %531 = vmatprep.subr.bf16.mxu0 0
    %532 = vmatpush1.bf16.msra.mxu0 %v511
    %533 = vmatprep.subr.bf16.mxu0 0
    %534 = vmatpush1.bf16.msra.mxu0 %v512
    %535 = vmatprep.subr.bf16.mxu0 0
    %536 = vmatpush1.bf16.msra.mxu0 %v513
    %537 = vmatprep.subr.bf16.mxu0 0
    %538 = vmatpush1.bf16.msra.mxu0 %v514
    %539 = vmatprep.subr.bf16.mxu0 0
    %540 = vmatpush1.bf16.msra.mxu0 0
    %541 = vmatprep.subr.bf16.mxu0 0
    %542 = vmatpush1.bf16.msra.mxu0 0
    %543 = vmatprep.subr.bf16.mxu0 0
    %544 = vmatpush1.bf16.msra.mxu0 0
    %545 = vmatprep.subr.bf16.mxu0 0
    %546 = vmatpush1.bf16.msra.mxu0 0
    %547 = vmatprep.subr.bf16.mxu0 0
    %548 = vmatpush1.bf16.msra.mxu0 0
    %549 = vmatprep.subr.bf16.mxu0 0
    %550 = vmatpush1.bf16.msra.mxu0 0
    %551 = vmatprep.subr.bf16.mxu0 0
    %552 = vmatpush1.bf16.msra.mxu0 0
    %553 = vmatprep.subr.bf16.mxu0 0
    %554 = vmatpush1.bf16.msra.mxu0 0
    %555 = vmatprep.mubr.bf16.mxu0 0
    %556 = vmatmul.mubr.bf16.gmra.mrb[0].mxu0 %v451
    %v557 = vpop.f32.mrb[0].mxu0
    %v558 = vadd.f32 %v473, %v557
    %v559 = vpop.f32.mrb[0].mxu0
    %v560 = vpop.f32.mrb[0].mxu0
    %v561 = vadd.f32 %v473, %v560
    %v562 = vpop.f32.mrb[0].mxu0
    %563 = vdwg.mxu0
    %v564 = vtanh.pop %v558
    %v565 = vtanh.pop %v561
    %v566 = vpack.c.bf16 %v565, %v564
    %v567 = vld [vmem:[#allocation12] sm:$0xf]
    %v568 = vld [vmem:[#allocation12 + $0x4] sm:$0xf]
    %v569 = vld [vmem:[#allocation12 + $0x8] sm:$0xf]
    %v570 = vld [vmem:[#allocation12 + $0xc] sm:$0xf]
    %v571 = vld [vmem:[#allocation12 + $0x10] sm:$0xf]
    %v572 = vld [vmem:[#allocation12 + $0x14] sm:$0xf]
    %v573 = vld [vmem:[#allocation12 + $0x18] sm:$0xf]
    %v574 = vld [vmem:[#allocation12 + $0x1c] sm:$0xf]
    %v575 = vld [vmem:[#allocation12 + $0x20] sm:$0xf]
    %v576 = vld [vmem:[#allocation12 + $0x24] sm:$0xf]
    %v577 = vld [vmem:[#allocation12 + $0x28] sm:$0xf]
    %v578 = vld [vmem:[#allocation12 + $0x2c] sm:$0xf]
    %v579 = vld [vmem:[#allocation12 + $0x30] sm:$0xf]
    %v580 = vld [vmem:[#allocation12 + $0x34] sm:$0xf]
    %v581 = vld [vmem:[#allocation12 + $0x38] sm:$0xf]
    %v582 = vld [vmem:[#allocation12 + $0x3c] sm:$0xf]
    %v583 = vld [vmem:[#allocation13] sm:$0x1]
    %v585 = vlaneseq
    %v586 = vshrl.u32 %v585, 7
    %v587 = vsub.s32 0, %v586
    %v588 = vrot.slane %v583, %v587
    %v606 = vunpack.c.l.b16 %v567
    %v607 = vunpack.c.l.b16 %v568
    %v608 = vunpack.c.l.b16 %v569
    %v609 = vunpack.c.l.b16 %v570
    %v610 = vunpack.c.l.b16 %v571
    %v611 = vunpack.c.l.b16 %v572
    %v612 = vunpack.c.l.b16 %v573
    %v613 = vunpack.c.l.b16 %v574
    %v614 = vunpack.c.l.b16 %v575
    %v615 = vunpack.c.l.b16 %v576
    %v616 = vunpack.c.l.b16 %v577
    %v617 = vunpack.c.l.b16 %v578
    %v618 = vunpack.c.l.b16 %v579
    %v619 = vunpack.c.l.b16 %v580
    %v620 = vunpack.c.l.b16 %v581
    %v621 = vunpack.c.l.b16 %v582
    %v622 = vpack.c.b16 %v607, %v606
    %v623 = vpack.c.b16 %v609, %v608
    %v624 = vpack.c.b16 %v611, %v610
    %v625 = vpack.c.b16 %v613, %v612
    %v626 = vpack.c.b16 %v615, %v614
    %v627 = vpack.c.b16 %v617, %v616
    %v628 = vpack.c.b16 %v619, %v618
    %v629 = vpack.c.b16 %v621, %v620
    %638 = vmatprep.subr.bf16.mxu0 0
    %639 = vmatpush1.bf16.msra.mxu0 %v622
    %640 = vmatprep.subr.bf16.mxu0 0
    %641 = vmatpush1.bf16.msra.mxu0 %v623
    %642 = vmatprep.subr.bf16.mxu0 0
    %643 = vmatpush1.bf16.msra.mxu0 %v624
    %644 = vmatprep.subr.bf16.mxu0 0
    %645 = vmatpush1.bf16.msra.mxu0 %v625
    %646 = vmatprep.subr.bf16.mxu0 0
    %647 = vmatpush1.bf16.msra.mxu0 %v626
    %648 = vmatprep.subr.bf16.mxu0 0
    %649 = vmatpush1.bf16.msra.mxu0 %v627
    %650 = vmatprep.subr.bf16.mxu0 0
    %651 = vmatpush1.bf16.msra.mxu0 %v628
    %652 = vmatprep.subr.bf16.mxu0 0
    %653 = vmatpush1.bf16.msra.mxu0 %v629
    %654 = vmatprep.subr.bf16.mxu0 0
    %655 = vmatpush1.bf16.msra.mxu0 0
    %656 = vmatprep.subr.bf16.mxu0 0
    %657 = vmatpush1.bf16.msra.mxu0 0
    %658 = vmatprep.subr.bf16.mxu0 0
    %659 = vmatpush1.bf16.msra.mxu0 0
    %660 = vmatprep.subr.bf16.mxu0 0
    %661 = vmatpush1.bf16.msra.mxu0 0
    %662 = vmatprep.subr.bf16.mxu0 0
    %663 = vmatpush1.bf16.msra.mxu0 0
    %664 = vmatprep.subr.bf16.mxu0 0
    %665 = vmatpush1.bf16.msra.mxu0 0
    %666 = vmatprep.subr.bf16.mxu0 0
    %667 = vmatpush1.bf16.msra.mxu0 0
    %668 = vmatprep.subr.bf16.mxu0 0
    %669 = vmatpush1.bf16.msra.mxu0 0
    %670 = vmatprep.mubr.bf16.mxu0 0
    %671 = vmatmul.mubr.bf16.gmra.mrb[0].mxu0 %v566
    %v672 = vpop.f32.mrb[0].mxu0
    %v673 = vadd.f32 %v588, %v672
    %v674 = vpop.f32.mrb[0].mxu0
    %v675 = vpop.f32.mrb[0].mxu0
    %v676 = vadd.f32 %v588, %v675
    %v677 = vpop.f32.mrb[0].mxu0
    %678 = vdwg.mxu0
    %v679 = vtanh.pop %v673
    %v680 = vtanh.pop %v676
    %v681 = vpack.c.bf16 %v680, %v679
    %v682 = vld [vmem:[%s11] sm:$0xf]
    %v683 = vld [vmem:[%s11 + $0x4] sm:$0xf]
    %v684 = vld [vmem:[%s11 + $0x8] sm:$0xf]
    %v685 = vld [vmem:[%s11 + $0xc] sm:$0xf]
    %v686 = vld [vmem:[%s11 + $0x10] sm:$0xf]
    %v687 = vld [vmem:[%s11 + $0x14] sm:$0xf]
    %v688 = vld [vmem:[%s11 + $0x18] sm:$0xf]
    %v689 = vld [vmem:[%s11 + $0x1c] sm:$0xf]
    %v690 = vld [vmem:[%s11 + $0x20] sm:$0xf]
    %v691 = vld [vmem:[%s11 + $0x24] sm:$0xf]
    %v692 = vld [vmem:[%s11 + $0x28] sm:$0xf]
    %v693 = vld [vmem:[%s11 + $0x2c] sm:$0xf]
    %v694 = vld [vmem:[%s11 + $0x30] sm:$0xf]
    %v695 = vld [vmem:[%s11 + $0x34] sm:$0xf]
    %v696 = vld [vmem:[%s11 + $0x38] sm:$0xf]
    %v697 = vld [vmem:[%s11 + $0x3c] sm:$0xf]
    %v698 = vld [vmem:[%s12] sm:$0x1]
    %v700 = vlaneseq
    %v701 = vshrl.u32 %v700, 7
    %v702 = vsub.s32 0, %v701
    %v703 = vrot.slane %v698, %v702
    %v721 = vunpack.c.l.b16 %v682
    %v722 = vunpack.c.l.b16 %v683
    %v723 = vunpack.c.l.b16 %v684
    %v724 = vunpack.c.l.b16 %v685
    %v725 = vunpack.c.l.b16 %v686
    %v726 = vunpack.c.l.b16 %v687
    %v727 = vunpack.c.l.b16 %v688
    %v728 = vunpack.c.l.b16 %v689
    %v729 = vunpack.c.l.b16 %v690
    %v730 = vunpack.c.l.b16 %v691
    %v731 = vunpack.c.l.b16 %v692
    %v732 = vunpack.c.l.b16 %v693
    %v733 = vunpack.c.l.b16 %v694
    %v734 = vunpack.c.l.b16 %v695
    %v735 = vunpack.c.l.b16 %v696
    %v736 = vunpack.c.l.b16 %v697
    %v737 = vpack.c.b16 %v722, %v721
    %v738 = vpack.c.b16 %v724, %v723
    %v739 = vpack.c.b16 %v726, %v725
    %v740 = vpack.c.b16 %v728, %v727
    %v741 = vpack.c.b16 %v730, %v729
    %v742 = vpack.c.b16 %v732, %v731
    %v743 = vpack.c.b16 %v734, %v733
    %v744 = vpack.c.b16 %v736, %v735
    %753 = vmatprep.subr.bf16.mxu0 0
    %754 = vmatpush1.bf16.msra.mxu0 %v737
    %755 = vmatprep.subr.bf16.mxu0 0
    %756 = vmatpush1.bf16.msra.mxu0 %v738
    %757 = vmatprep.subr.bf16.mxu0 0
    %758 = vmatpush1.bf16.msra.mxu0 %v739
    %759 = vmatprep.subr.bf16.mxu0 0
    %760 = vmatpush1.bf16.msra.mxu0 %v740
    %761 = vmatprep.subr.bf16.mxu0 0
    %762 = vmatpush1.bf16.msra.mxu0 %v741
    %763 = vmatprep.subr.bf16.mxu0 0
    %764 = vmatpush1.bf16.msra.mxu0 %v742
    %765 = vmatprep.subr.bf16.mxu0 0
    %766 = vmatpush1.bf16.msra.mxu0 %v743
    %767 = vmatprep.subr.bf16.mxu0 0
    %768 = vmatpush1.bf16.msra.mxu0 %v744
    %769 = vmatprep.subr.bf16.mxu0 0
    %770 = vmatpush1.bf16.msra.mxu0 0
    %771 = vmatprep.subr.bf16.mxu0 0
    %772 = vmatpush1.bf16.msra.mxu0 0
    %773 = vmatprep.subr.bf16.mxu0 0
    %774 = vmatpush1.bf16.msra.mxu0 0
    %775 = vmatprep.subr.bf16.mxu0 0
    %776 = vmatpush1.bf16.msra.mxu0 0
    %777 = vmatprep.subr.bf16.mxu0 0
    %778 = vmatpush1.bf16.msra.mxu0 0
    %779 = vmatprep.subr.bf16.mxu0 0
    %780 = vmatpush1.bf16.msra.mxu0 0
    %781 = vmatprep.subr.bf16.mxu0 0
    %782 = vmatpush1.bf16.msra.mxu0 0
    %783 = vmatprep.subr.bf16.mxu0 0
    %784 = vmatpush1.bf16.msra.mxu0 0
    %785 = vmatprep.mubr.bf16.mxu0 0
    %786 = vmatmul.mubr.bf16.gmra.mrb[0].mxu0 %v681
    %v787 = vpop.f32.mrb[0].mxu0
    %v788 = vadd.f32 %v703, %v787
    %v789 = vpop.f32.mrb[0].mxu0
    %v790 = vpop.f32.mrb[0].mxu0
    %v791 = vadd.f32 %v703, %v790
    %v792 = vpop.f32.mrb[0].mxu0
    %793 = vdwg.mxu0
    %794 = vst [vmem:[%s13] sm:$0xff] %v788
    %795 = vst [vmem:[%s13 + $0x8] sm:$0xff] %v791
    // Predicated region
    $region86: #{model_regv4_t_forward.1} parent=1 // pred_check
      _
    $region87: #{model_regv4_t_forward.1} parent=1 // pred_check_branch
      %797 = sbr.rel (0) target = $region89
    $region88: #{model_regv4_t_forward.1} parent=1 // pred_region
      _
    $region89: #{model_regv4_t_forward.1} parent=1 // pred_fallthru
      _
    // Predicated region
    $region90: #{model_regv4_t_forward.1} parent=1 // pred_check
      _
    $region91: #{model_regv4_t_forward.1} parent=1 // pred_check_branch
      %799 = sbr.rel (0) target = $region93
    $region92: #{model_regv4_t_forward.1} parent=1 // pred_region
      _
    $region93: #{model_regv4_t_forward.1} parent=1 // pred_fallthru
      _
    %800 = vsyncpa [#allocation3], 1
    %801 = vsyncpa [#allocation5], 1
    %802 = vsyncpa [#allocation8], 1
    %803 = vsyncpa [#allocation11], 1
    %804 = vsyncpa [#allocation14], 1

</llo_original>
